<compile_context>
chip_gen: v5e
topology: v5e:2x2
jax: 0.10.0
libtpu: 0.0.40
codegen_flags: <defaults>
</compile_context>

<pallas_src>
import jax
import jax.numpy as jnp
from jax.experimental import pallas as pl
from jax.experimental.pallas import tpu as pltpu


def _cgsa_mul_kernel(att_ref, x_ref, o_ref):
    # att_ref: VMEM (1, 1, HW)  x.dtype -- precomputed per-batch spatial attention map
    # x_ref:   VMEM (1, tc, HW) x.dtype -- current channel tile of x
    # o_ref:   VMEM (1, tc, HW) x.dtype -- attended output tile
    o_ref[...] = x_ref[...] * att_ref[...]          # broadcast over the channel axis


def _pick_c_tile(C, HW, itemsize, inout_budget_bytes=8 * 1024 * 1024):
    """Channel tile size + tile count.

    The double-buffered (in + out) tiles stay within ~8 MiB (~2 MiB per tile is
    already at the HBM roofline plateau), the tile is aligned to the packed
    sublane multiple for the dtype, and non-dividing C gets an aligned tile
    with a ragged (cdiv) grid instead of a giant full-C block.
    """
    align = max(8, 32 // itemsize)                  # f32 -> 8, bf16 -> 16, int8 -> 32
    max_tc = max(1, inout_budget_bytes // (4 * HW * itemsize))
    if max_tc >= C:
        return C, 1
    t = (max_tc // align) * align
    while t >= align:
        if C % t == 0:                              # aligned tile that divides C exactly
            return t, C // t
        t -= align
    # No aligned divisor within budget: aligned tile + ragged grid.  Pallas
    # clamps the boundary DMAs, so garbage in the padded tail rows of the last
    # tile is never written back (kernel is pure elementwise).
    t = max(align, (max_tc // align) * align)
    return t, -(-C // t)


def _maybe_buffered_spec(block_shape, index_map, bufs):
    """BlockSpec with deeper pipelining when supported; plain spec otherwise."""
    if bufs is not None:
        try:
            return pl.BlockSpec(block_shape, index_map,
                                pipeline_mode=pl.Buffered(bufs))
        except (TypeError, AttributeError):
            pass
    return pl.BlockSpec(block_shape, index_map)


def center_guided_spatial_attention(x, conv_w, conv_b, k):
    """x: (B, C, H, W); conv_w: (1, k, 1, 1); conv_b: (1,). Returns (B, C, H, W)."""
    B, C, H, W = x.shape
    assert C >= k, "need at least k channels for top-k"
    HW = H * W
    xf = x.reshape(B, C, HW)                        # lane-dense layout

    # ---- Tiny wrapper glue (O(B*k*HW), fused by XLA): center-pixel top-k,
    #      channel gather, 1x1 conv (k-reduction), sigmoid.  Only the (B,1,HW)
    #      attention map is materialized and fed to the kernel.
    # TODO(synk): top-k / data-dependent gather have no clean static-BlockSpec
    # Pallas equivalent; an in-kernel per-row DMA gather is possible but the
    # wrapper-side fused form was preferred per the perf review.
    center = xf[:, :, (H // 2) * W + (W // 2)]                          # (B, C)
    _, topk_idx = jax.lax.top_k(center, k)                              # (B, k)
    gathered = jnp.take_along_axis(xf, topk_idx[:, :, None], axis=1)    # (B, k, HW), fused
    w_flat = conv_w.reshape(k).astype(jnp.float32)
    b_flat = conv_b.reshape(()).astype(jnp.float32)
    logits = jnp.einsum('bkx,k->bx', gathered.astype(jnp.float32), w_flat) + b_flat
    att = jax.nn.sigmoid(logits)[:, None, :].astype(x.dtype)            # (B, 1, HW)

    # ---- Guarantee a 128-multiple lane axis (full-lane unmasked stores).
    HW_pad = -(-HW // 128) * 128
    if HW_pad != HW:
        pad = ((0, 0), (0, 0), (0, HW_pad - HW))
        xf = jnp.pad(xf, pad)
        att = jnp.pad(att, pad)

    itemsize = jnp.dtype(x.dtype).itemsize
    tc, n_c = _pick_c_tile(C, HW_pad, itemsize)

    # Deeper pipelining only pays when the grid is long and the tiles are small.
    bufs = 3 if (B * n_c >= 8 and tc * HW_pad * itemsize <= 2 * 1024 * 1024) else None

    # Explicit VMEM budget: double-buffered x/out tiles + double-buffered att
    # block, 2x headroom, >=16 MiB (v5e scoped default), <=40 MiB (v7x headroom).
    tile_bytes = tc * HW_pad * itemsize
    need = 4 * tile_bytes + 2 * HW_pad * itemsize
    vmem_limit = int(min(max(2 * need, 16 * 1024 * 1024), 40 * 1024 * 1024))

    cost = pl.CostEstimate(
        flops=B * C * HW_pad,
        transcendentals=0,
        bytes_accessed=(2 * B * C * HW_pad + B * HW_pad) * itemsize,
    )

    out = pl.pallas_call(
        _cgsa_mul_kernel,
        out_shape=jax.ShapeDtypeStruct((B, C, HW_pad), x.dtype),
        grid=(B, n_c),
        in_specs=[
            # per-batch attention map: same block for every C tile of a batch
            pl.BlockSpec((1, 1, HW_pad), lambda bi, ci: (bi, 0, 0)),
            # current channel tile of x
            _maybe_buffered_spec((1, tc, HW_pad), lambda bi, ci: (bi, ci, 0), bufs),
        ],
        out_specs=_maybe_buffered_spec((1, tc, HW_pad), lambda bi, ci: (bi, ci, 0), bufs),
        compiler_params=pltpu.CompilerParams(
            dimension_semantics=("parallel", "parallel"),
            vmem_limit_bytes=vmem_limit,
        ),
        cost_estimate=cost,
    )(att, xf)

    if HW_pad != HW:
        out = out[:, :, :HW]
    return out.reshape(B, C, H, W)


def _reference(x, conv_w, conv_b, k):
    """Pure-JAX reference mirroring the PyTorch forward exactly."""
    B, C, H, W = x.shape
    center = x[:, :, H // 2, W // 2]
    _, idx = jax.lax.top_k(center, k)
    gathered = jnp.take_along_axis(x, idx[:, :, None, None], axis=1)     # (B, k, H, W)
    logits = (jnp.einsum('bkhw,k->bhw', gathered, conv_w.reshape(k))
              + conv_b.reshape(()))                                      # (B, H, W)
    att = jax.nn.sigmoid(logits)[:, None, :, :]
    return x * att


if __name__ == "__main__":
    # Module config: k=10 channels selected, Conv2d(k, 1, kernel_size=1).
    K = 10
    B, C, H, W = 2, 16, 16, 16          # C must be >= k

    key = jax.random.PRNGKey(0)
    kx, kw, kb = jax.random.split(key, 3)
    x = jax.random.normal(kx, (B, C, H, W), dtype=jnp.float32)
    conv_w = jax.random.normal(kw, (1, K, 1, 1), dtype=jnp.float32) * 0.1
    conv_b = jax.random.normal(kb, (1,), dtype=jnp.float32) * 0.1

    out = jax.block_until_ready(center_guided_spatial_attention(x, conv_w, conv_b, K))
    ref = _reference(x, conv_w, conv_b, K)
    assert out.shape == (B, C, H, W)
    assert jnp.allclose(out, ref, atol=1e-5, rtol=1e-5), "mismatch vs reference"

    # Non-128-multiple spatial size exercises the lane-axis padding path.
    x2 = jax.random.normal(kx, (B, C, 14, 14), dtype=jnp.float32)
    out2 = jax.block_until_ready(center_guided_spatial_attention(x2, conv_w, conv_b, K))
    ref2 = _reference(x2, conv_w, conv_b, K)
    assert jnp.allclose(out2, ref2, atol=1e-5, rtol=1e-5), "mismatch vs reference (padded HW)"

    print("KERNEL_OK")
</pallas_src>

<mosaic_0001>
module attributes {stable_mosaic.version = 11 : i64} {
  func.func @_cgsa_mul_kernel(%arg0: i32, %arg1: i32, %arg2: memref<1x1x256xf32, #tpu.memory_space<vmem>>, %arg3: memref<1x16x256xf32, #tpu.memory_space<vmem>>, %arg4: memref<1x16x256xf32, #tpu.memory_space<vmem>>) attributes {dimension_semantics = [#tpu.dimension_semantics<parallel>, #tpu.dimension_semantics<parallel>], iteration_bounds = array<i64: 2, 1>, scalar_prefetch = 0 : i64, scratch_operands = 0 : i64, tpu.core_type = #tpu.core_type<tc>, window_params = [{transform_indices = @transform_0, window_bounds = array<i64: 1, 1, 256>}, {transform_indices = @transform_1, window_bounds = array<i64: 1, 16, 256>}, {transform_indices = @transform_2, window_bounds = array<i64: 1, 16, 256>}]} {
    %c0 = arith.constant 0 : index
    %c0_0 = arith.constant 0 : index
    %c0_1 = arith.constant 0 : index
    %0 = vector.load %arg3[%c0, %c0_0, %c0_1] : memref<1x16x256xf32, #tpu.memory_space<vmem>>, vector<1x16x256xf32>
    %c0_2 = arith.constant 0 : index
    %c0_3 = arith.constant 0 : index
    %c0_4 = arith.constant 0 : index
    %1 = vector.load %arg2[%c0_2, %c0_3, %c0_4] : memref<1x1x256xf32, #tpu.memory_space<vmem>>, vector<1x1x256xf32>
    %2 = vector.broadcast %1 : vector<1x1x256xf32> to vector<1x16x256xf32>
    %3 = arith.mulf %0, %2 : vector<1x16x256xf32>
    %c0_5 = arith.constant 0 : index
    %c0_6 = arith.constant 0 : index
    %c0_7 = arith.constant 0 : index
    %4 = vector.load %arg4[%c0_5, %c0_6, %c0_7] : memref<1x16x256xf32, #tpu.memory_space<vmem>>, vector<1x16x256xf32>
    tpu.vector_store %arg4[%c0_5, %c0_6, %c0_7], %3 {strides = array<i32>} : memref<1x16x256xf32, #tpu.memory_space<vmem>>, vector<1x16x256xf32>,
    return
  }
  func.func @transform_0(%arg0: i32, %arg1: i32) -> (i32, i32, i32) {
    %c0_i32 = arith.constant 0 : i32
    %c0_i32_0 = arith.constant 0 : i32
    %c0_i32_1 = arith.constant 0 : i32
    return %arg0, %c0_i32, %c0_i32_0 : i32, i32, i32
  }
  func.func @transform_1(%arg0: i32, %arg1: i32) -> (i32, i32, i32) {
    %c0_i32 = arith.constant 0 : i32
    %c0_i32_0 = arith.constant 0 : i32
    return %arg0, %arg1, %c0_i32 : i32, i32, i32
  }
  func.func @transform_2(%arg0: i32, %arg1: i32) -> (i32, i32, i32) {
    %c0_i32 = arith.constant 0 : i32
    %c0_i32_0 = arith.constant 0 : i32
    return %arg0, %arg1, %c0_i32 : i32, i32, i32
  }
}

</mosaic_0001>

<llo_original>
// kernel: tpu_custom_call.1
$region0: #{tpu_custom_call.1}
  #allocation0 [shape = 'u32[]', space=smem, size = 0x4, offset = 0x4, fixed_abs, tag = 'smem constant byte address 0x4 - core index']
  #allocation1 [shape = 'u32[72,128]{1,0:T(1,128)}', space=vmem, size = 0x9000, scoped, tag = 'internal scratch']
  %s0 = inlined_call_operand.hbm [shape: f32[2,1,256], index: 0, kind: input, shape index: {}]
  %s1 = inlined_call_operand.hbm [shape: f32[2,16,256], index: 1, kind: input, shape index: {}]
  %s2 = inlined_call_operand.hbm [shape: f32[2,16,256], index: 2, kind: output, shape index: {}]
  %s3 = sld [smem:[#allocation0]]
  $region49: #{tpu_custom_call.1} parent=0
    _
  %s5 = ssub.s32 1, %s3
  %s6 = scalar_select 0, %s5, %s3
  $region1: #{tpu_custom_call.1} parent=0
    #allocation2 [shape = 'u8[2048]{0}', space=vmem, size = 0x800, scoped, tag = 'input window, operand 0']
    #allocation3 [shape = 's32[2]{0}', space=sflag, size = 0x8, scoped, tag = 'scoped memory for tpu_custom_call.1']
    #allocation4 [shape = 's32[2]{0}', space=sflag, size = 0x8, scoped, tag = 'scoped memory for tpu_custom_call.1']
    #allocation5 [shape = 'u8[32768]{0}', space=vmem, size = 0x8000, scoped, tag = 'input window, operand 1']
    #allocation6 [shape = 's32[2]{0}', space=sflag, size = 0x8, scoped, tag = 'scoped memory for tpu_custom_call.1']
    #allocation7 [shape = 'u8[32768]{0}', space=vmem, size = 0x8000, scoped, tag = 'output window, operand 0']
    %7 = vsyncpa [#allocation3], 0
    %s8 = scalar_lea.sflag [#allocation3], 1
    %9 = vsyncpa %s8, 0
    %10 = vsyncpa [#allocation6], 0
    %s11 = scalar_lea.sflag [#allocation6], 1
    %12 = vsyncpa %s11, 0
    %13 = vsyncpa [#allocation4], 0
    %s14 = scalar_lea.sflag [#allocation4], 1
    %15 = vsyncpa %s14, 0
    loop: start=0, step=1, limit=4
    $region2: #{tpu_custom_call.1} parent=1 // loop_pre_header
      _
    $region3: #{tpu_custom_call.1} parent=1 // loop_header
      %s17 = sphi 0, %s21
      %p18 = scmp.ge.s32.totalorder %s17, 4
      %s24 = sphi 0, %s36
      %s25 = sphi 0, %s32
      %s26 = sphi 0, %s24
      %s27 = sphi 0, %s25
      %s28 = sphi 0, %s26
      %s29 = sphi 0, %s27
      %s39 = sphi 0, %s41
      %s42 = sphi 0, %s39
      %s43 = sphi 0, %s42
      %s59 = sphi 0, %s43
      %s67 = sphi 0, %s69
      %s70 = sphi 0, %s67
      %s71 = sphi 0, %s70
      %s87 = sphi 0, %s71
      %s95 = sphi 0, %s97
      %s98 = sphi 0, %s95
      %s99 = sphi 0, %s98
      %s115 = sphi 0, %s99
    $region4: #{tpu_custom_call.1} parent=1 // loop_header_branch
      %20 = sbr.rel (%p18) target = $region8
    $region5: #{tpu_custom_call.1} parent=1 // loop_body
      %s22 = ssub.s32 %s17, 1
      %s23 = ssub.s32 %s17, 2
      %s30 = sadd.s32 1, %s25
      %p31 = scmp.ge.s32.totalorder %s30, 1
      %s32 = scalar_select %p31, 0, %s30
      %s33 = sadd.s32 1, %s24
      %s34 = scalar_select %p31, %s33, %s24
      %p35 = scmp.ge.s32.totalorder %s34, 2
      %s36 = scalar_select %p35, 0, %s34
      %s37 = ssub.s32 %s24, %s36
      %p38 = scmp.eq.s32.totalorder %s37, 0
      %s40 = sadd.s32 %s39, 1
      %s41 = scalar_select %p38, %s39, %s40
      %p44 = pneg %p38
      %p45 = scmp.eq.s32.totalorder %s17, 1
      %p46 = por %p44, %p45
      %p47 = scmp.ne.s32.totalorder %s39, %s42
      %p48 = scmp.eq.s32.totalorder %s17, 0
      %p49 = por %p47, %p48
      %p50 = scmp.ne.s32.totalorder %s39, %s42
      %p51 = scmp.eq.s32.totalorder %s22, 1
      %p52 = por %p50, %p51
      %p53 = scmp.ne.s32.totalorder %s42, %s43
      %p54 = scmp.eq.s32.totalorder %s22, 0
      %p55 = por %p53, %p54
      %p56 = scmp.ne.s32.totalorder %s42, %s43
      %p57 = scmp.eq.s32.totalorder %s23, 1
      %p58 = por %p56, %p57
      %p60 = scmp.ne.s32.totalorder %s43, %s59
      %p61 = scmp.eq.s32.totalorder %s23, 0
      %p62 = por %p60, %p61
      %s63 = ssub.s32 %s24, %s36
      %s64 = ssub.s32 %s25, %s32
      %s65 = sor.u32 %s63, %s64
      %p66 = scmp.eq.s32.totalorder %s65, 0
      %s68 = sadd.s32 %s67, 1
      %s69 = scalar_select %p66, %s67, %s68
      %p72 = pneg %p66
      %p73 = scmp.eq.s32.totalorder %s17, 1
      %p74 = por %p72, %p73
      %p75 = scmp.ne.s32.totalorder %s67, %s70
      %p76 = scmp.eq.s32.totalorder %s17, 0
      %p77 = por %p75, %p76
      %p78 = scmp.ne.s32.totalorder %s67, %s70
      %p79 = scmp.eq.s32.totalorder %s22, 1
      %p80 = por %p78, %p79
      %p81 = scmp.ne.s32.totalorder %s70, %s71
      %p82 = scmp.eq.s32.totalorder %s22, 0
      %p83 = por %p81, %p82
      %p84 = scmp.ne.s32.totalorder %s70, %s71
      %p85 = scmp.eq.s32.totalorder %s23, 1
      %p86 = por %p84, %p85
      %p88 = scmp.ne.s32.totalorder %s71, %s87
      %p89 = scmp.eq.s32.totalorder %s23, 0
      %p90 = por %p88, %p89
      %s91 = ssub.s32 %s24, %s36
      %s92 = ssub.s32 %s25, %s32
      %s93 = sor.u32 %s91, %s92
      %p94 = scmp.eq.s32.totalorder %s93, 0
      %s96 = sadd.s32 %s95, 1
      %s97 = scalar_select %p94, %s95, %s96
      %p100 = pneg %p94
      %p101 = scmp.eq.s32.totalorder %s17, 1
      %p102 = por %p100, %p101
      %p103 = scmp.ne.s32.totalorder %s95, %s98
      %p104 = scmp.eq.s32.totalorder %s17, 0
      %p105 = por %p103, %p104
      %p106 = scmp.ne.s32.totalorder %s95, %s98
      %p107 = scmp.eq.s32.totalorder %s22, 1
      %p108 = por %p106, %p107
      %p109 = scmp.ne.s32.totalorder %s98, %s99
      %p110 = scmp.eq.s32.totalorder %s22, 0
      %p111 = por %p109, %p110
      %p112 = scmp.ne.s32.totalorder %s98, %s99
      %p113 = scmp.eq.s32.totalorder %s23, 1
      %p114 = por %p112, %p113
      %p116 = scmp.ne.s32.totalorder %s99, %s115
      %p117 = scmp.eq.s32.totalorder %s23, 0
      %p118 = por %p116, %p117
      %p119 = scmp.le.s32.totalorder 1, %s17
      %p120 = scmp.lt.s32.totalorder %s17, 3
      %p121 = pnand %p119, %p120
      %p122 = pneg %p121
      // Predicated region
      $region9: #{tpu_custom_call.1} parent=5 // pred_check
        _
      $region10: #{tpu_custom_call.1} parent=5 // pred_check_branch
        %124 = sbr.rel (%p121) target = $region12
      $region11: #{tpu_custom_call.1} parent=5 // pred_region
        %s125 = ssub.s32 %s17, 1
      $region12: #{tpu_custom_call.1} parent=5 // pred_fallthru
        _
      %p126 = scmp.lt.s32.totalorder %s17, 2
      // Predicated region
      $region13: #{tpu_custom_call.1} parent=5 // pred_check
        %p127 = pneg %p126
      $region14: #{tpu_custom_call.1} parent=5 // pred_check_branch
        %129 = sbr.rel (%p127) target = $region16
      $region15: #{tpu_custom_call.1} parent=5 // pred_region
        // Predicated region
        $region17: #{tpu_custom_call.1} parent=15 // pred_check
          %p130 = pneg %p49
        $region18: #{tpu_custom_call.1} parent=15 // pred_check_branch
          %132 = sbr.rel (%p130) target = $region20
        $region19: #{tpu_custom_call.1} parent=15 // pred_region
          %s133 = sand.u32 %s39, 1
          %s134 = scalar_lea.sflag [#allocation3], %s133
          %s135 = sand.u32 %s39, 1
          %s136 = smul.addr %s135, 2
          %s137 = scalar_lea.vmem [#allocation2], %s136
          %139 = vsyncadd %s134, 0
          %s140 = smul.addr %s24, 2
          %s141 = scalar_lea.hbm %s0, %s140
          %s143 = sshll.u32 %s141, 4
          %s144 = int_to_ptr.hbm [resolvable:$true] %s143
          %s145 = sshll.u32 %s137, 4
          %s146 = int_to_ptr.vmem [resolvable:$true] %s145
          %148 = dma.hbm_to_vmem [thread:$0]  %s144, 32, %s146, %s134
        $region20: #{tpu_custom_call.1} parent=15 // pred_fallthru
          _
        // Predicated region
        $region21: #{tpu_custom_call.1} parent=15 // pred_check
          %p149 = pneg %p77
        $region22: #{tpu_custom_call.1} parent=15 // pred_check_branch
          %151 = sbr.rel (%p149) target = $region24
        $region23: #{tpu_custom_call.1} parent=15 // pred_region
          %s152 = sand.u32 %s67, 1
          %s153 = scalar_lea.sflag [#allocation6], %s152
          %s154 = sand.u32 %s67, 1
          %s155 = smul.addr %s154, 32
          %s156 = scalar_lea.vmem [#allocation5], %s155
          %s157 = smul.u32 2, %s25
          %159 = vsyncadd %s153, 0
          %s160 = smul.addr %s157, 2
          %s161 = smul.addr %s24, 4
          %s162 = sadd.s32 %s160, %s161
          %s163 = smul.addr %s162, 8
          %s164 = scalar_lea.hbm %s1, %s163
          %s165 = sshll.u32 %s164, 4
          %s166 = int_to_ptr.hbm [resolvable:$true] %s165
          %s167 = sshll.u32 %s156, 4
          %s168 = int_to_ptr.vmem [resolvable:$true] %s167
          %173 = dma.hbm_to_vmem [thread:$0]  %s166, 512, %s168, %s153, 256, 256, 16
        $region24: #{tpu_custom_call.1} parent=15 // pred_fallthru
          _
      $region16: #{tpu_custom_call.1} parent=5 // pred_fallthru
        _
      %p174 = scmp.le.s32.totalorder 1, %s17
      %p175 = scmp.lt.s32.totalorder %s17, 3
      %p176 = pnand %p174, %p175
      %p177 = pneg %p176
      // Predicated region
      $region25: #{tpu_custom_call.1} parent=5 // pred_check
        _
      $region26: #{tpu_custom_call.1} parent=5 // pred_check_branch
        %179 = sbr.rel (%p176) target = $region28
      $region27: #{tpu_custom_call.1} parent=5 // pred_region
        %s180 = ssub.s32 %s17, 1
        %s181 = sand.u32 %s42, 1
        %s182 = scalar_lea.sflag [#allocation3], %s181
        %s183 = sand.u32 %s42, 1
        %s184 = smul.addr %s183, 2
        %s185 = scalar_lea.vmem [#allocation2], %s184
        // Predicated region
        $region29: #{tpu_custom_call.1} parent=27 // pred_check
          %p186 = pneg %p55
        $region30: #{tpu_custom_call.1} parent=27 // pred_check_branch
          %188 = sbr.rel (%p186) target = $region32
        $region31: #{tpu_custom_call.1} parent=27 // pred_region
          %190 = dma.done %s182, 32
        $region32: #{tpu_custom_call.1} parent=27 // pred_fallthru
          _
        %s191 = sand.u32 %s70, 1
        %s192 = scalar_lea.sflag [#allocation6], %s191
        %s193 = sand.u32 %s70, 1
        %s194 = smul.addr %s193, 32
        %s195 = scalar_lea.vmem [#allocation5], %s194
        // Predicated region
        $region33: #{tpu_custom_call.1} parent=27 // pred_check
          %p196 = pneg %p83
        $region34: #{tpu_custom_call.1} parent=27 // pred_check_branch
          %198 = sbr.rel (%p196) target = $region36
        $region35: #{tpu_custom_call.1} parent=27 // pred_region
          %200 = dma.done %s192, 512
        $region36: #{tpu_custom_call.1} parent=27 // pred_fallthru
          _
        %s201 = sand.u32 %s42, 1
        %s202 = scalar_lea.sflag [#allocation3], %s201
        %s203 = sand.u32 %s42, 1
        %s204 = smul.addr %s203, 2
        %s205 = scalar_lea.vmem [#allocation2], %s204
        %p206 = pneg %p55
        %p207 = pneg %p52
        %s208 = sand.u32 %s70, 1
        %s209 = scalar_lea.sflag [#allocation6], %s208
        %s210 = sand.u32 %s70, 1
        %s211 = smul.addr %s210, 32
        %s212 = scalar_lea.vmem [#allocation5], %s211
        %p213 = pneg %p83
        %p214 = pneg %p80
        %p215 = pneg %p111
        %p216 = pneg %p108
        %s217 = sand.u32 %s98, 1
        %s218 = scalar_lea.sflag [#allocation4], %s217
        %s219 = sand.u32 %s98, 1
        %s220 = smul.addr %s219, 32
        %s221 = scalar_lea.vmem [#allocation7], %s220
        %s222 = smul.u32 2, %s27
        %s223 = smul.u32 2, %s27
        %v224 = vld [vmem:[%s195] sm:$0xff]
        %v225 = vld [vmem:[%s195 + $0x8] sm:$0xff]
        %v226 = vld [vmem:[%s195 + $0x10] sm:$0xff]
        %v227 = vld [vmem:[%s195 + $0x18] sm:$0xff]
        %v228 = vld [vmem:[%s185] sm:$0x3]
        %v230 = vperm.slane %v228, 0
        %v231 = vperm.slane %v228, 1
        %v234 = vmul.f32 %v224, %v230
        %v235 = vmul.f32 %v225, %v231
        %v236 = vmul.f32 %v226, %v230
        %v237 = vmul.f32 %v227, %v231
        %238 = vst [vmem:[%s221] sm:$0xff] %v234
        %239 = vst [vmem:[%s221 + $0x8] sm:$0xff] %v235
        %240 = vst [vmem:[%s221 + $0x10] sm:$0xff] %v236
        %241 = vst [vmem:[%s221 + $0x18] sm:$0xff] %v237
        %s242 = sand.u32 %s98, 1
        %s243 = scalar_lea.sflag [#allocation4], %s242
        %s244 = sand.u32 %s98, 1
        %s245 = smul.addr %s244, 32
        %s246 = scalar_lea.vmem [#allocation7], %s245
        // Predicated region
        $region37: #{tpu_custom_call.1} parent=27 // pred_check
          %p247 = pneg %p108
        $region38: #{tpu_custom_call.1} parent=27 // pred_check_branch
          %249 = sbr.rel (%p247) target = $region40
        $region39: #{tpu_custom_call.1} parent=27 // pred_region
          %s250 = smul.u32 2, %s27
          %252 = vsyncadd %s243, 0
          %s253 = smul.addr %s250, 2
          %s254 = smul.addr %s26, 4
          %s255 = sadd.s32 %s253, %s254
          %s256 = smul.addr %s255, 8
          %s257 = scalar_lea.hbm %s2, %s256
          %s258 = sshll.u32 %s246, 4
          %s259 = int_to_ptr.vmem [resolvable:$true] %s258
          %s260 = sshll.u32 %s257, 4
          %s261 = int_to_ptr.hbm [resolvable:$true] %s260
          %266 = dma.vmem_to_hbm [thread:$0]  %s259, 512, %s261, %s243, 256, 256, 16
        $region40: #{tpu_custom_call.1} parent=27 // pred_fallthru
          _
      $region28: #{tpu_custom_call.1} parent=5 // pred_fallthru
        _
      %p267 = scmp.le.s32.totalorder 2, %s17
      // Predicated region
      $region41: #{tpu_custom_call.1} parent=5 // pred_check
        %p268 = pneg %p267
      $region42: #{tpu_custom_call.1} parent=5 // pred_check_branch
        %270 = sbr.rel (%p268) target = $region44
      $region43: #{tpu_custom_call.1} parent=5 // pred_region
        %s271 = ssub.s32 %s17, 2
        // Predicated region
        $region45: #{tpu_custom_call.1} parent=43 // pred_check
          %p272 = pneg %p114
        $region46: #{tpu_custom_call.1} parent=43 // pred_check_branch
          %274 = sbr.rel (%p272) target = $region48
        $region47: #{tpu_custom_call.1} parent=43 // pred_region
          %s275 = sand.u32 %s99, 1
          %s276 = scalar_lea.sflag [#allocation4], %s275
          %s277 = sand.u32 %s99, 1
          %s278 = smul.addr %s277, 32
          %s279 = scalar_lea.vmem [#allocation7], %s278
          %281 = dma.done %s276, 512
        $region48: #{tpu_custom_call.1} parent=43 // pred_fallthru
          _
      $region44: #{tpu_custom_call.1} parent=5 // pred_fallthru
        _
    $region6: #{tpu_custom_call.1} parent=1 // loop_footer
      %s21 = sadd.s32 1, %s17
    $region7: #{tpu_custom_call.1} parent=1 // loop_footer_branch
      %16 = sbr.rel target = $region3
    $region8: #{tpu_custom_call.1} parent=1 // loop_exit
      _
    %282 = vsyncpa [#allocation3], 1
    %s283 = scalar_lea.sflag [#allocation3], 1
    %284 = vsyncpa %s283, 1
    %285 = vsyncpa [#allocation6], 1
    %s286 = scalar_lea.sflag [#allocation6], 1
    %287 = vsyncpa %s286, 1
    %288 = vsyncpa [#allocation4], 1
    %s289 = scalar_lea.sflag [#allocation4], 1
    %290 = vsyncpa %s289, 1

</llo_original>
